<compile_context>
chip_gen: v5e
topology: v5e:2x2
jax: 0.10.0
libtpu: 0.0.40
codegen_flags: <defaults>
</compile_context>

<pallas_src>
import functools

import jax
import jax.numpy as jnp
from jax.experimental import pallas as pl
from jax.experimental.pallas import tpu as pltpu


def _contrastive_kernel(x0_ref, x1_ref, y_ref, out_ref, acc_ref, *, margin, scale):
    i = pl.program_id(0)

    @pl.when(i == 0)
    def _init():
        acc_ref[...] = jnp.zeros_like(acc_ref)

    # Hot path (per batch tile): elementwise diff, squared-distance reduction
    # over features, hinge on the euclidean distance, per-row weighted loss.
    x0 = x0_ref[...].astype(jnp.float32)                     # (TB, D)
    x1 = x1_ref[...].astype(jnp.float32)                     # (TB, D)
    y = y_ref[...]                                           # (TB, 1) f32

    diff = x0 - x1
    dist_sq = jnp.sum(diff * diff, axis=1, keepdims=True)    # (TB, 1) lane reduce
    dist = jnp.sqrt(dist_sq)                                 # EUP
    hinge = jnp.maximum(margin - dist, 0.0)                  # clamp(min=0)
    acc_ref[...] += y * dist_sq + (1.0 - y) * hinge * hinge  # per-row accumulate

    @pl.when(i == pl.num_programs(0) - 1)
    def _finalize():
        # scale == 0.5 / B  (folds "/ 2.0 / batch" into a single multiply)
        total = jnp.sum(acc_ref[...], keepdims=True)         # (1, 1)
        out_ref[...] = total * scale


def _round_up(a, b):
    return ((a + b - 1) // b) * b


def contrastive_loss(x0, x1, y, margin=1.0, block_rows=None):
    """Pallas TPU implementation of ContrastiveLoss.forward.

    x0, x1: (B, D) float arrays; y: (B,) labels (1 = similar, 0 = dissimilar).
    Returns a scalar float32 loss.
    """
    B, D = x0.shape
    itemsize = jnp.dtype(x0.dtype).itemsize
    # Minimum sublane granularity for the input dtype (8 f32, 16 bf16, 32 int8).
    min_rows = max(8, 32 // itemsize)

    if block_rows is None:
        # Biggest batch tile keeping 2 inputs x 2 pipeline buffers within
        # ~16 MiB -> comfortably under the v7x 64 MiB VMEM (and v5e/v6e 128 MiB).
        vmem_budget = 16 * 1024 * 1024
        tb = vmem_budget // (4 * max(D, 1) * itemsize)
        tb = (tb // min_rows) * min_rows
        tb = max(min_rows, min(1024, tb))
    else:
        tb = max(min_rows, _round_up(block_rows, min_rows))
    tb = min(tb, _round_up(B, min_rows))

    Bp = _round_up(B, tb)
    pad = Bp - B
    y2d = y.reshape(B, 1).astype(jnp.float32)
    if pad:
        # Padded rows: zero features with y=1 contribute exactly 0 to the loss.
        x0 = jnp.pad(x0, ((0, pad), (0, 0)))
        x1 = jnp.pad(x1, ((0, pad), (0, 0)))
        y2d = jnp.pad(y2d, ((0, pad), (0, 0)), constant_values=1.0)

    kernel = functools.partial(
        _contrastive_kernel, margin=float(margin), scale=0.5 / float(B))

    out = pl.pallas_call(
        kernel,
        out_shape=jax.ShapeDtypeStruct((1, 1), jnp.float32),
        grid=(Bp // tb,),
        in_specs=[
            pl.BlockSpec((tb, D), lambda i: (i, 0)),   # x0 tile
            pl.BlockSpec((tb, D), lambda i: (i, 0)),   # x1 tile
            pl.BlockSpec((tb, 1), lambda i: (i, 0)),   # y tile
        ],
        out_specs=pl.BlockSpec((1, 1), lambda i: (0, 0)),      # resident scalar
        scratch_shapes=[pltpu.VMEM((tb, 1), jnp.float32)],     # per-row accumulator
        compiler_params=pltpu.CompilerParams(
            dimension_semantics=("arbitrary",),                # axis carries reduction
            vmem_limit_bytes=48 * 1024 * 1024,
        ),
    )(x0, x1, y2d)
    return out[0, 0]


def _reference(x0, x1, y, margin=1.0):
    diff = x0 - x1
    dist_sq = jnp.sum(diff * diff, axis=1)
    dist = jnp.sqrt(dist_sq)
    hinge = jnp.maximum(margin - dist, 0.0)
    loss = y * dist_sq + (1.0 - y) * hinge * hinge
    return jnp.sum(loss) / 2.0 / x0.shape[0]


if __name__ == "__main__":
    key = jax.random.PRNGKey(0)
    k0, k1, k2 = jax.random.split(key, 3)

    # Single-tile path.
    B, D = 8, 32
    x0 = jax.random.normal(k0, (B, D), dtype=jnp.float32)
    x1 = jax.random.normal(k1, (B, D), dtype=jnp.float32)
    y = jax.random.bernoulli(k2, 0.5, (B,)).astype(jnp.float32)

    loss = jax.block_until_ready(contrastive_loss(x0, x1, y, margin=1.0))
    ref = _reference(x0, x1, y, margin=1.0)
    assert jnp.allclose(loss, ref, rtol=1e-5, atol=1e-6), (loss, ref)

    # Multi-tile path (exercises grid accumulation + batch padding).
    B2, D2 = 21, 32
    k3, k4, k5 = jax.random.split(jax.random.PRNGKey(0), 3)
    a0 = jax.random.normal(k3, (B2, D2), dtype=jnp.float32)
    a1 = jax.random.normal(k4, (B2, D2), dtype=jnp.float32)
    yb = jax.random.bernoulli(k5, 0.5, (B2,)).astype(jnp.float32)
    loss2 = jax.block_until_ready(
        contrastive_loss(a0, a1, yb, margin=1.0, block_rows=8))
    ref2 = _reference(a0, a1, yb, margin=1.0)
    assert jnp.allclose(loss2, ref2, rtol=1e-5, atol=1e-6), (loss2, ref2)

    print("KERNEL_OK")
</pallas_src>

<mosaic_0001>
module attributes {stable_mosaic.version = 11 : i64} {
  func.func @_contrastive_kernel(%arg0: i32, %arg1: memref<8x32xf32, #tpu.memory_space<vmem>>, %arg2: memref<8x32xf32, #tpu.memory_space<vmem>>, %arg3: memref<8x1xf32, #tpu.memory_space<vmem>>, %arg4: memref<1x1xf32, #tpu.memory_space<vmem>>, %arg5: memref<8x1xf32, #tpu.memory_space<vmem>>) attributes {dimension_semantics = [#tpu.dimension_semantics<arbitrary>], iteration_bounds = array<i64: 1>, scalar_prefetch = 0 : i64, scratch_operands = 1 : i64, tpu.core_type = #tpu.core_type<tc>, window_params = [{transform_indices = @transform_0, window_bounds = array<i64: 8, 32>}, {transform_indices = @transform_1, window_bounds = array<i64: 8, 32>}, {transform_indices = @transform_2, window_bounds = array<i64: 8, 1>}, {pipeline_mode = #tpu.pipeline_mode<synchronous>, transform_indices = @transform_3, window_bounds = array<i64: 1, 1>}]} {
    %c0_i32 = arith.constant 0 : i32
    %0 = arith.cmpi eq, %arg0, %c0_i32 : i32
    %1 = arith.extui %0 : i1 to i32
    %c0_i32_0 = arith.constant 0 : i32
    %2 = arith.cmpi ne, %1, %c0_i32_0 : i32
    scf.if %2 {
      %cst_15 = arith.constant 0.000000e+00 : f32
      %27 = vector.broadcast %cst_15 : f32 to vector<8x1xf32>
      %c0_16 = arith.constant 0 : index
      %c0_17 = arith.constant 0 : index
      %28 = vector.load %arg5[%c0_16, %c0_17] : memref<8x1xf32, #tpu.memory_space<vmem>>, vector<8x1xf32>
      tpu.vector_store %arg5[%c0_16, %c0_17], %27 {strides = array<i32>} : memref<8x1xf32, #tpu.memory_space<vmem>>, vector<8x1xf32>,
    } else {
    }
    %c0 = arith.constant 0 : index
    %c0_1 = arith.constant 0 : index
    %3 = vector.load %arg1[%c0, %c0_1] : memref<8x32xf32, #tpu.memory_space<vmem>>, vector<8x32xf32>
    %c0_2 = arith.constant 0 : index
    %c0_3 = arith.constant 0 : index
    %4 = vector.load %arg2[%c0_2, %c0_3] : memref<8x32xf32, #tpu.memory_space<vmem>>, vector<8x32xf32>
    %c0_4 = arith.constant 0 : index
    %c0_5 = arith.constant 0 : index
    %5 = vector.load %arg3[%c0_4, %c0_5] : memref<8x1xf32, #tpu.memory_space<vmem>>, vector<8x1xf32>
    %6 = arith.subf %3, %4 : vector<8x32xf32>
    %7 = arith.mulf %6, %6 : vector<8x32xf32>
    %cst = arith.constant dense<0.000000e+00> : vector<8xf32>
    %8 = vector.multi_reduction <add>, %7, %cst [1] : vector<8x32xf32> to vector<8xf32>
    %9 = vector.shape_cast %8 : vector<8xf32> to vector<8x1xf32>
    %10 = math.sqrt %9 : vector<8x1xf32>
    %cst_6 = arith.constant 1.000000e+00 : f32
    %11 = vector.broadcast %cst_6 : f32 to vector<8x1xf32>
    %12 = arith.subf %11, %10 : vector<8x1xf32>
    %cst_7 = arith.constant 0.000000e+00 : f32
    %13 = vector.broadcast %cst_7 : f32 to vector<8x1xf32>
    %14 = arith.maximumf %12, %13 : vector<8x1xf32>
    %c0_8 = arith.constant 0 : index
    %c0_9 = arith.constant 0 : index
    %15 = vector.load %arg5[%c0_8, %c0_9] : memref<8x1xf32, #tpu.memory_space<vmem>>, vector<8x1xf32>
    %16 = arith.mulf %5, %9 : vector<8x1xf32>
    %cst_10 = arith.constant 1.000000e+00 : f32
    %17 = vector.broadcast %cst_10 : f32 to vector<8x1xf32>
    %18 = arith.subf %17, %5 : vector<8x1xf32>
    %19 = arith.mulf %18, %14 : vector<8x1xf32>
    %20 = arith.mulf %19, %14 : vector<8x1xf32>
    %21 = arith.addf %16, %20 : vector<8x1xf32>
    %22 = arith.addf %15, %21 : vector<8x1xf32>
    %c0_11 = arith.constant 0 : index
    %c0_12 = arith.constant 0 : index
    %23 = vector.load %arg5[%c0_11, %c0_12] : memref<8x1xf32, #tpu.memory_space<vmem>>, vector<8x1xf32>
    tpu.vector_store %arg5[%c0_11, %c0_12], %22 {strides = array<i32>} : memref<8x1xf32, #tpu.memory_space<vmem>>, vector<8x1xf32>,
    %c0_i32_13 = arith.constant 0 : i32
    %24 = arith.cmpi eq, %arg0, %c0_i32_13 : i32
    %25 = arith.extui %24 : i1 to i32
    %c0_i32_14 = arith.constant 0 : i32
    %26 = arith.cmpi ne, %25, %c0_i32_14 : i32
    scf.if %26 {
      %c0_15 = arith.constant 0 : index
      %c0_16 = arith.constant 0 : index
      %27 = vector.load %arg5[%c0_15, %c0_16] : memref<8x1xf32, #tpu.memory_space<vmem>>, vector<8x1xf32>
      %28 = vector.shape_cast %27 : vector<8x1xf32> to vector<1x8x1xf32>
      %cst_17 = arith.constant dense<0.000000e+00> : vector<1xf32>
      %29 = vector.multi_reduction <add>, %28, %cst_17 [1, 2] : vector<1x8x1xf32> to vector<1xf32>
      %30 = vector.shape_cast %29 : vector<1xf32> to vector<1x1x1xf32>
      %31 = vector.extract %30[0, 0, 0] : f32 from vector<1x1x1xf32>
      %32 = vector.broadcast %31 : f32 to vector<1x1xf32>
      %cst_18 = arith.constant 6.250000e-02 : f32
      %33 = vector.broadcast %cst_18 : f32 to vector<1x1xf32>
      %34 = arith.mulf %32, %33 : vector<1x1xf32>
      %c0_19 = arith.constant 0 : index
      %c0_20 = arith.constant 0 : index
      %35 = vector.load %arg4[%c0_19, %c0_20] : memref<1x1xf32, #tpu.memory_space<vmem>>, vector<1x1xf32>
      tpu.vector_store %arg4[%c0_19, %c0_20], %34 {strides = array<i32>} : memref<1x1xf32, #tpu.memory_space<vmem>>, vector<1x1xf32>,
    } else {
    }
    return
  }
  func.func @transform_0(%arg0: i32) -> (i32, i32) {
    %c0_i32 = arith.constant 0 : i32
    %c0_i32_0 = arith.constant 0 : i32
    return %arg0, %c0_i32 : i32, i32
  }
  func.func @transform_1(%arg0: i32) -> (i32, i32) {
    %c0_i32 = arith.constant 0 : i32
    %c0_i32_0 = arith.constant 0 : i32
    return %arg0, %c0_i32 : i32, i32
  }
  func.func @transform_2(%arg0: i32) -> (i32, i32) {
    %c0_i32 = arith.constant 0 : i32
    %c0_i32_0 = arith.constant 0 : i32
    return %arg0, %c0_i32 : i32, i32
  }
  func.func @transform_3(%arg0: i32) -> (i32, i32) {
    %c0_i32 = arith.constant 0 : i32
    %c0_i32_0 = arith.constant 0 : i32
    %c0_i32_1 = arith.constant 0 : i32
    return %c0_i32, %c0_i32_0 : i32, i32
  }
}

</mosaic_0001>

<llo_original>
// kernel: tpu_custom_call.1
$region0: #{tpu_custom_call.1}
  #allocation0 [shape = 'u32[]', space=smem, size = 0x4, offset = 0x4, fixed_abs, tag = 'smem constant byte address 0x4 - core index']
  #allocation1 [shape = 'u32[72,128]{1,0:T(1,128)}', space=vmem, size = 0x9000, scoped, tag = 'internal scratch']
  #allocation2 [shape = 'f32[8,1]{1,0:T(8,128)}', space=vmem, size = 0x1000, scoped, tag = 'scratch operand']
  %s0 = inlined_call_operand.vmem [shape: f32[8,32], index: 0, kind: input, shape index: {}]
  %s1 = inlined_call_operand.hbm [shape: f32[8,32], index: 1, kind: input, shape index: {}]
  %s2 = inlined_call_operand.vmem [shape: f32[8,1], index: 2, kind: input, shape index: {}]
  %s3 = inlined_call_operand.hbm [shape: f32[1,1], index: 3, kind: output, shape index: {}]
  %s4 = sld [smem:[#allocation0]]
  $region34: #{tpu_custom_call.1} parent=0
    _
  %s6 = ssub.s32 1, %s4
  %s7 = scalar_select 0, %s6, %s4
  $region1: #{tpu_custom_call.1} parent=0
    #allocation3 [shape = 'u8[4096]{0}', space=vmem, size = 0x1000, scoped, tag = 'input window, operand 1, single buffered']
    #allocation4 [shape = 's32[1]{0}', space=sflag, size = 0x4, scoped, tag = 'scoped memory for tpu_custom_call.1']
    #allocation5 [shape = 's32[1]{0}', space=sflag, size = 0x4, scoped, tag = 'scoped memory for tpu_custom_call.1']
    #allocation6 [shape = 'u8[512]{0}', space=vmem, size = 0x400, scoped, tag = 'output window, operand 0, single buffered']
    %8 = vsyncpa [#allocation4], 0
    %9 = vsyncpa [#allocation5], 0
    // Predicated region
    $region2: #{tpu_custom_call.1} parent=1 // pred_check
      _
    $region3: #{tpu_custom_call.1} parent=1 // pred_check_branch
      %11 = sbr.rel (0) target = $region5
    $region4: #{tpu_custom_call.1} parent=1 // pred_region
      _
    $region5: #{tpu_custom_call.1} parent=1 // pred_fallthru
      _
    // Predicated region
    $region6: #{tpu_custom_call.1} parent=1 // pred_check
      _
    $region7: #{tpu_custom_call.1} parent=1 // pred_check_branch
      %13 = sbr.rel (0) target = $region9
    $region8: #{tpu_custom_call.1} parent=1 // pred_region
      %15 = vsyncadd [#allocation4], 0
      %s17 = sshll.u32 %s1, 4
      %s18 = int_to_ptr.hbm [resolvable:$true] %s17
      %s19 = sshll.u32 [#allocation3], 4
      %s20 = int_to_ptr.vmem [resolvable:$true] %s19
      %22 = dma.hbm_to_vmem [thread:$0]  %s18, 128, %s20, [#allocation4]
    $region9: #{tpu_custom_call.1} parent=1 // pred_fallthru
      _
    // Predicated region
    $region10: #{tpu_custom_call.1} parent=1 // pred_check
      _
    $region11: #{tpu_custom_call.1} parent=1 // pred_check_branch
      %24 = sbr.rel (0) target = $region13
    $region12: #{tpu_custom_call.1} parent=1 // pred_region
      _
    $region13: #{tpu_custom_call.1} parent=1 // pred_fallthru
      _
    // Predicated region
    $region14: #{tpu_custom_call.1} parent=1 // pred_check
      _
    $region15: #{tpu_custom_call.1} parent=1 // pred_check_branch
      %26 = sbr.rel (0) target = $region17
    $region16: #{tpu_custom_call.1} parent=1 // pred_region
      %28 = dma.done [#allocation4], 128
    $region17: #{tpu_custom_call.1} parent=1 // pred_fallthru
      _
    %p29 = scmp.eq.s32.totalorder 0, 0
    // Predicated region
    $region18: #{tpu_custom_call.1} parent=1 // pred_check
      %p30 = pneg %p29
    $region19: #{tpu_custom_call.1} parent=1 // pred_check_branch
      %32 = sbr.rel (%p30) target = $region21
    $region20: #{tpu_custom_call.1} parent=1 // pred_region
      %vm33 = vcmask 7168
      %34 = vst.msk [vmem:[#allocation2] sm:$0xff] %vm33, 0.0
    $region21: #{tpu_custom_call.1} parent=1 // pred_fallthru
      _
    %v35 = vld [vmem:[%s0] sm:$0xff]
    %v36 = vld [vmem:[#allocation3] sm:$0xff]
    %v37 = vld [vmem:[%s2] sm:$0xff]
    %v38 = vsub.f32 %v35, %v36
    %v39 = vmul.f32 %v38, %v38
    %vm40 = vcmask 261120
    %v41 = vsel %vm40, %v39, 0.0
    %42 = vadd.xlane.f32.xlu0 %v41
    %v43 = vpop.xlane.xlu0 %42
    %v44 = vrsqrt.pop %v43
    %v45 = vmul.f32 %v44, %v43
    %v46 = vmul.f32 %v45, %v44
    %v47 = vmul.f32 0.5, %v46
    %v48 = vsub.f32 1.5, %v47
    %v49 = vmul.f32 %v44, %v48
    %v50 = vmul.f32 %v43, %v49
    %vm51 = vcmp.eq.f32.partialorder %v43, inf
    %v52 = vsel %vm51, %v43, %v50
    %vm53 = vcmp.eq.f32.partialorder %v43, 0.0
    %v54 = vand.u32 %v43, 2147483648
    %v55 = vsel %vm53, %v54, %v52
    %v56 = vsub.f32 1.0, %v55
    %v57 = vmax.f32 %v56, 0.0
    %v58 = vld [vmem:[#allocation2] sm:$0xff]
    %v59 = vmul.f32 %v37, %v43
    %v60 = vsub.f32 1.0, %v37
    %v61 = vmul.f32 %v60, %v57
    %v62 = vmul.f32 %v61, %v57
    %v63 = vadd.f32 %v59, %v62
    %v64 = vadd.f32 %v58, %v63
    %vm65 = vcmask 7168
    %66 = vst.msk [vmem:[#allocation2] sm:$0xff] %vm65, %v64
    // Predicated region
    $region22: #{tpu_custom_call.1} parent=1 // pred_check
      %p67 = pneg %p29
    $region23: #{tpu_custom_call.1} parent=1 // pred_check_branch
      %69 = sbr.rel (%p67) target = $region25
    $region24: #{tpu_custom_call.1} parent=1 // pred_region
      %v70 = vld [vmem:[#allocation2] sm:$0xff]
      %v71 = vsel %vm65, %v70, 0.0
      %72 = vadd.xlane.f32.xlu0 %v71
      %v73 = vpop.xlane.xlu0 %72
      %v74 = vrot.slane %v73, 4
      %v75 = vadd.f32 %v73, %v74
      %v76 = vrot.slane %v75, 2
      %v77 = vadd.f32 %v75, %v76
      %v78 = vrot.slane %v77, 1
      %v79 = vadd.f32 %v77, %v78
      %s80 = vtos %v79
      %v81 = vstv %s80
      %v82 = vmul.f32 %v81, 0.0625
      %vm83 = vcmask 0
      %84 = vst.msk [vmem:[#allocation6] sm:$0x1] %vm83, %v82
    $region25: #{tpu_custom_call.1} parent=1 // pred_fallthru
      _
    // Predicated region
    $region26: #{tpu_custom_call.1} parent=1 // pred_check
      _
    $region27: #{tpu_custom_call.1} parent=1 // pred_check_branch
      %86 = sbr.rel (0) target = $region29
    $region28: #{tpu_custom_call.1} parent=1 // pred_region
      %88 = vsyncadd [#allocation5], 0
      %s90 = sshll.u32 [#allocation6], 4
      %s91 = int_to_ptr.vmem [resolvable:$true] %s90
      %s92 = sshll.u32 %s3, 4
      %s93 = int_to_ptr.hbm [resolvable:$true] %s92
      %95 = dma.vmem_to_hbm [thread:$0]  %s91, 16, %s93, [#allocation5]
    $region29: #{tpu_custom_call.1} parent=1 // pred_fallthru
      _
    // Predicated region
    $region30: #{tpu_custom_call.1} parent=1 // pred_check
      _
    $region31: #{tpu_custom_call.1} parent=1 // pred_check_branch
      %97 = sbr.rel (0) target = $region33
    $region32: #{tpu_custom_call.1} parent=1 // pred_region
      %99 = dma.done [#allocation5], 16
    $region33: #{tpu_custom_call.1} parent=1 // pred_fallthru
      _
    %100 = vsyncpa [#allocation4], 1
    %101 = vsyncpa [#allocation5], 1

</llo_original>
